<compile_context>
chip_gen: v6e
topology: v6e:2x2x1
jax: 0.10.0
libtpu: 0.0.40
codegen_flags: <defaults>
</compile_context>

<pallas_src>
import jax
import jax.numpy as jnp
from jax.experimental import pallas as pl
from jax.experimental.pallas import tpu as pltpu


_TM_FULL_MAX = 1024          # keep the whole B as one (un-tiled) M block up to this
_TK_FULL_MAX = 1024          # keep the whole In as one (un-tiled) K block up to this
_TN_FULL_MAX = 512           # keep the whole Out as one (un-tiled) N block up to this
_EBLK_MAX = 64               # max ensemble members batched per grid step
_TILE_BUDGET = 28 * 1024 * 1024      # target VMEM for double-buffered blocks
_VMEM_LIMIT_CAP = 48 * 1024 * 1024   # never request more scoped VMEM than this


def _round_up(x: int, m: int) -> int:
    return ((x + m - 1) // m) * m


def _pad_to(a, target_shape):
    pads = [(0, t - s) for s, t in zip(a.shape, target_shape)]
    if all(p == (0, 0) for p in pads):
        return a
    return jnp.pad(a, pads)


def _largest_divisor_tile(dim_p: int, candidates, fallback: int) -> int:
    for c in candidates:
        if c <= dim_p and dim_p % c == 0:
            return c
    return fallback


def _shrink_tile(cur: int, dim_p: int, floor: int) -> int:
    c = cur
    while c > floor:
        c //= 2
        if c >= floor and dim_p % c == 0:
            return c
    return cur


def _choose_dim(dim: int, full_max: int, align: int, candidates):
    """Return (tile, padded_dim). Small dims use the full (unpadded) extent."""
    if dim <= full_max:
        return dim, dim
    dim_p = _round_up(dim, align)
    return _largest_divisor_tile(dim_p, candidates, align), dim_p


# ------------------------------ kernels -------------------------------------


def _kernel_single_k(x_ref, w_ref, b_ref, o_ref):
    # Whole reduction in one step: no scratch, no init/finalize branches.
    acc = jnp.einsum("eik,eko->eio", x_ref[...], w_ref[...],
                     preferred_element_type=jnp.float32)
    o_ref[...] = (acc + b_ref[...].astype(jnp.float32)).astype(o_ref.dtype)


def _kernel_acc_in_out(x_ref, w_ref, b_ref, o_ref):
    # Multi-K, f32 output: accumulate directly into the k-resident output block
    # (its index_map ignores k), initialized with the broadcast bias.
    k = pl.program_id(3)

    @pl.when(k == 0)
    def _init():
        o_ref[...] = jnp.broadcast_to(b_ref[...].astype(o_ref.dtype), o_ref.shape)

    o_ref[...] += jnp.einsum("eik,eko->eio", x_ref[...], w_ref[...],
                             preferred_element_type=jnp.float32)


def _kernel_acc_scratch(x_ref, w_ref, b_ref, o_ref, acc_ref):
    # Multi-K, non-f32 output: f32 VMEM accumulator, bias-initialized.
    k = pl.program_id(3)

    @pl.when(k == 0)
    def _init():
        acc_ref[...] = jnp.broadcast_to(
            b_ref[...].astype(jnp.float32), acc_ref.shape)

    acc_ref[...] += jnp.einsum("eik,eko->eio", x_ref[...], w_ref[...],
                               preferred_element_type=jnp.float32)

    @pl.when(k == pl.num_programs(3) - 1)
    def _finalize():
        o_ref[...] = acc_ref[...].astype(o_ref.dtype)


# ------------------------------ wrapper --------------------------------------


@jax.jit
def ensembled_linear(x, weight, bias):
    """x: (E, B, In), weight: (E, In, Out), bias: (E, 1, Out) -> (E, B, Out)."""
    E, B, In = x.shape
    _, _, Out = weight.shape
    out_dtype = x.dtype
    itemsize = jnp.dtype(out_dtype).itemsize

    # --- tile / padding selection (shapes are static under jit) -------------
    tm, B_p = _choose_dim(B, _TM_FULL_MAX, 8,
                          (1024, 512, 256, 128, 64, 32, 16, 8))
    tk, In_p = _choose_dim(In, _TK_FULL_MAX, 128, (2048, 1024, 512, 256, 128))
    tn, Out_p = _choose_dim(Out, _TN_FULL_MAX, 128, (1024, 512, 256, 128))

    def tile_bytes(tm_, tk_, tn_):
        return (tm_ * tk_ + tk_ * tn_ + tn_ + tm_ * tn_) * itemsize

    # Shrink tiled (padded) dims if one double-buffered block set would not fit
    # the budget.  Full-extent dims are already bounded by the *_FULL_MAX caps.
    while 2 * tile_bytes(tm, tk, tn) > _TILE_BUDGET:
        new_tk = _shrink_tile(tk, In_p, 128) if In > _TK_FULL_MAX else tk
        if new_tk != tk:
            tk = new_tk
            continue
        new_tn = _shrink_tile(tn, Out_p, 128) if Out > _TN_FULL_MAX else tn
        if new_tn != tn:
            tn = new_tn
            continue
        new_tm = _shrink_tile(tm, B_p, 8) if B > _TM_FULL_MAX else tm
        if new_tm != tm:
            tm = new_tm
            continue
        break

    grid_m = B_p // tm
    grid_n = Out_p // tn
    grid_k = In_p // tk

    single_k = grid_k == 1
    inplace_f32 = (not single_k) and out_dtype == jnp.float32
    acc_bytes_per_e = 0 if (single_k or inplace_f32) else tm * tn * 4

    # Ensemble members batched per grid step (amortizes ~0.35us/step overhead,
    # coalesces weight DMAs for tiny members), bounded by the VMEM budget.
    per_e_bytes = 2 * tile_bytes(tm, tk, tn) + acc_bytes_per_e
    e_blk = max(1, min(E, _EBLK_MAX, _TILE_BUDGET // per_e_bytes))
    # Keep >= 2 steps on the parallel axes when E >= 2 so both v7x TensorCores
    # are used (grid is a serial loop per core; negligible cost on v5e/v6e).
    if E >= 2 and grid_m * grid_n == 1 and pl.cdiv(E, e_blk) < 2:
        e_blk = (E + 1) // 2
    E_p = _round_up(E, e_blk)
    grid_e = E_p // e_blk

    x_p = _pad_to(x, (E_p, B_p, In_p))
    w_p = _pad_to(weight, (E_p, In_p, Out_p))
    b_p = _pad_to(bias, (E_p, 1, Out_p))

    grid = (grid_e, grid_m, grid_n, grid_k)

    # Scoped-VMEM: only raise past the per-generation defaults when the tiles
    # need it; cap at 48 MiB for headroom on v7x's 64 MiB physical VMEM.
    vmem_est = e_blk * per_e_bytes
    vmem_limit = None
    if vmem_est > 12 * 1024 * 1024:
        vmem_limit = min(int(vmem_est * 3 // 2), _VMEM_LIMIT_CAP)

    # Bytes include per-n-block x re-reads and per-m-block weight re-reads.
    cost = pl.CostEstimate(
        flops=2 * E_p * B_p * In_p * Out_p,
        transcendentals=0,
        bytes_accessed=itemsize * (grid_n * E_p * B_p * In_p
                                   + grid_m * E_p * In_p * Out_p
                                   + grid_m * E_p * Out_p
                                   + E_p * B_p * Out_p),
    )

    if single_k:
        kernel = _kernel_single_k
        scratch_shapes = ()
    elif inplace_f32:
        kernel = _kernel_acc_in_out
        scratch_shapes = ()
    else:
        kernel = _kernel_acc_scratch
        scratch_shapes = (pltpu.VMEM((e_blk, tm, tn), jnp.float32),)

    out_p = pl.pallas_call(
        kernel,
        out_shape=jax.ShapeDtypeStruct((E_p, B_p, Out_p), out_dtype),
        grid_spec=pltpu.PrefetchScalarGridSpec(
            num_scalar_prefetch=0,
            grid=grid,
            in_specs=[
                pl.BlockSpec((e_blk, tm, tk), lambda e, m, n, k: (e, m, k)),
                pl.BlockSpec((e_blk, tk, tn), lambda e, m, n, k: (e, k, n)),
                pl.BlockSpec((e_blk, 1, tn), lambda e, m, n, k: (e, 0, n)),
            ],
            out_specs=pl.BlockSpec((e_blk, tm, tn), lambda e, m, n, k: (e, m, n)),
            scratch_shapes=scratch_shapes,
        ),
        compiler_params=pltpu.CompilerParams(
            dimension_semantics=("parallel", "parallel", "parallel", "arbitrary"),
            vmem_limit_bytes=vmem_limit,
        ),
        cost_estimate=cost,
    )(x_p, w_p, b_p)

    if (E_p, B_p, Out_p) != (E, B, Out):
        out_p = out_p[:E, :B, :Out]
    return out_p


def init_params(key, ensemble_size, in_features, out_features, dtype=jnp.float32):
    """Matches the PyTorch module's reset_parameters:
    kaiming_uniform_(a=sqrt(5)) per layer => U(-1/sqrt(fan_in), 1/sqrt(fan_in))
    on weight; bias ~ U(-1/sqrt(fan_in), 1/sqrt(fan_in))."""
    kw, kb = jax.random.split(key)
    fan_in = in_features
    bound = 1.0 / jnp.sqrt(jnp.asarray(fan_in, dtype))
    weight = jax.random.uniform(
        kw, (ensemble_size, in_features, out_features), dtype,
        minval=-bound, maxval=bound)
    bias = jax.random.uniform(
        kb, (ensemble_size, 1, out_features), dtype,
        minval=-bound, maxval=bound)
    return weight, bias


if __name__ == "__main__":
    E, B, IN, OUT = 4, 8, 32, 32

    key = jax.random.PRNGKey(0)
    kx, kp = jax.random.split(key)
    x = jax.random.normal(kx, (E, B, IN), jnp.float32)
    weight, bias = init_params(kp, E, IN, OUT)

    out = ensembled_linear(x, weight, bias)
    out = jax.block_until_ready(out)

    # Reference check against plain JAX (same semantics as x @ W + b in torch).
    ref = jnp.einsum("ebi,eio->ebo", x, weight) + bias
    assert out.shape == (E, B, OUT)
    assert jnp.allclose(out, ref, atol=1e-5, rtol=1e-5)

    print("KERNEL_OK")
</pallas_src>

<mosaic_0001>
module attributes {stable_mosaic.version = 11 : i64} {
  func.func @_kernel_single_k(%arg0: i32, %arg1: i32, %arg2: i32, %arg3: i32, %arg4: memref<2x8x32xf32, #tpu.memory_space<vmem>>, %arg5: memref<2x32x32xf32, #tpu.memory_space<vmem>>, %arg6: memref<2x1x32xf32, #tpu.memory_space<vmem>>, %arg7: memref<2x8x32xf32, #tpu.memory_space<vmem>>) attributes {dimension_semantics = [#tpu.dimension_semantics<parallel>, #tpu.dimension_semantics<parallel>, #tpu.dimension_semantics<parallel>, #tpu.dimension_semantics<arbitrary>], iteration_bounds = array<i64: 2, 1, 1, 1>, scalar_prefetch = 0 : i64, scratch_operands = 0 : i64, tpu.core_type = #tpu.core_type<tc>, window_params = [{transform_indices = @transform_0, window_bounds = array<i64: 2, 8, 32>}, {transform_indices = @transform_1, window_bounds = array<i64: 2, 32, 32>}, {transform_indices = @transform_2, window_bounds = array<i64: 2, 1, 32>}, {transform_indices = @transform_3, window_bounds = array<i64: 2, 8, 32>}]} {
    %c0 = arith.constant 0 : index
    %c0_0 = arith.constant 0 : index
    %c0_1 = arith.constant 0 : index
    %0 = vector.load %arg4[%c0, %c0_0, %c0_1] : memref<2x8x32xf32, #tpu.memory_space<vmem>>, vector<2x8x32xf32>
    %c0_2 = arith.constant 0 : index
    %c0_3 = arith.constant 0 : index
    %c0_4 = arith.constant 0 : index
    %1 = vector.load %arg5[%c0_2, %c0_3, %c0_4] : memref<2x32x32xf32, #tpu.memory_space<vmem>>, vector<2x32x32xf32>
    "tpu.trace_start"() <{level = 10 : i32, message = "eik,eko->eio"}> : () -> ()
    %cst = arith.constant dense<0.000000e+00> : vector<2x8x32xf32>
    %2 = tpu.matmul %0, %1, %cst {dimension_numbers = #tpu.dot_dimension_numbers<[2], [1], [1], [2], [0, 0, 0, 1, 1, 2], [0], [0]>} : vector<2x8x32xf32>, vector<2x32x32xf32>, vector<2x8x32xf32> -> vector<2x8x32xf32>
    "tpu.trace_stop"() : () -> ()
    %c0_5 = arith.constant 0 : index
    %c0_6 = arith.constant 0 : index
    %c0_7 = arith.constant 0 : index
    %3 = vector.load %arg6[%c0_5, %c0_6, %c0_7] : memref<2x1x32xf32, #tpu.memory_space<vmem>>, vector<2x1x32xf32>
    %4 = vector.broadcast %3 : vector<2x1x32xf32> to vector<2x8x32xf32>
    %5 = arith.addf %2, %4 : vector<2x8x32xf32>
    %c0_8 = arith.constant 0 : index
    %c0_9 = arith.constant 0 : index
    %c0_10 = arith.constant 0 : index
    %6 = vector.load %arg7[%c0_8, %c0_9, %c0_10] : memref<2x8x32xf32, #tpu.memory_space<vmem>>, vector<2x8x32xf32>
    tpu.vector_store %arg7[%c0_8, %c0_9, %c0_10], %5 {strides = array<i32>} : memref<2x8x32xf32, #tpu.memory_space<vmem>>, vector<2x8x32xf32>,
    return
  }
  func.func @transform_0(%arg0: i32, %arg1: i32, %arg2: i32, %arg3: i32) -> (i32, i32, i32) {
    %c0_i32 = arith.constant 0 : i32
    return %arg0, %arg1, %arg3 : i32, i32, i32
  }
  func.func @transform_1(%arg0: i32, %arg1: i32, %arg2: i32, %arg3: i32) -> (i32, i32, i32) {
    %c0_i32 = arith.constant 0 : i32
    return %arg0, %arg3, %arg2 : i32, i32, i32
  }
  func.func @transform_2(%arg0: i32, %arg1: i32, %arg2: i32, %arg3: i32) -> (i32, i32, i32) {
    %c0_i32 = arith.constant 0 : i32
    %c0_i32_0 = arith.constant 0 : i32
    return %arg0, %c0_i32, %arg2 : i32, i32, i32
  }
  func.func @transform_3(%arg0: i32, %arg1: i32, %arg2: i32, %arg3: i32) -> (i32, i32, i32) {
    %c0_i32 = arith.constant 0 : i32
    return %arg0, %arg1, %arg2 : i32, i32, i32
  }
}

</mosaic_0001>

<llo_original>
// kernel: ensembled_linear.1
$region0: #{ensembled_linear.1}
  #allocation0 [shape = 'u32[]', space=smem, size = 0x4, offset = 0x4, fixed_abs, tag = 'smem constant byte address 0x4 - core index']
  #allocation1 [shape = 'u32[144,128]{1,0:T(1,128)}', space=vmem, size = 0x12000, scoped, tag = 'internal scratch']
  %s0 = inlined_call_operand.hbm [shape: f32[4,8,32], index: 0, kind: input, shape index: {}]
  %s1 = inlined_call_operand.hbm [shape: f32[4,32,32], index: 1, kind: input, shape index: {}]
  %s2 = inlined_call_operand.hbm [shape: f32[4,1,32], index: 2, kind: input, shape index: {}]
  %s3 = inlined_call_operand.hbm [shape: f32[4,8,32], index: 3, kind: output, shape index: {}]
  %s4 = sld [smem:[#allocation0]]
  $region57: #{ensembled_linear.1} parent=0
    _
  %s6 = ssub.s32 1, %s4
  %s7 = scalar_select 0, %s6, %s4
  $region1: #{ensembled_linear.1} parent=0
    #allocation2 [shape = 'u8[16384]{0}', space=vmem, size = 0x4000, scoped, tag = 'input window, operand 0']
    #allocation3 [shape = 's32[2]{0}', space=sflag, size = 0x8, scoped, tag = 'scoped memory for ensembled_linear.1']
    #allocation4 [shape = 's32[2]{0}', space=sflag, size = 0x8, scoped, tag = 'scoped memory for ensembled_linear.1']
    #allocation5 [shape = 'u8[65536]{0}', space=vmem, size = 0x10000, scoped, tag = 'input window, operand 1']
    #allocation6 [shape = 's32[2]{0}', space=sflag, size = 0x8, scoped, tag = 'scoped memory for ensembled_linear.1']
    #allocation7 [shape = 'u8[2048]{0}', space=vmem, size = 0x800, scoped, tag = 'input window, operand 2']
    #allocation8 [shape = 'u8[16384]{0}', space=vmem, size = 0x4000, scoped, tag = 'output window, operand 0']
    %8 = vsyncpa [#allocation3], 0
    %s9 = scalar_lea.sflag [#allocation3], 1
    %10 = vsyncpa %s9, 0
    %11 = vsyncpa [#allocation6], 0
    %s12 = scalar_lea.sflag [#allocation6], 1
    %13 = vsyncpa %s12, 0
    %14 = vsyncpa [#allocation4], 0
    %s15 = scalar_lea.sflag [#allocation4], 1
    %16 = vsyncpa %s15, 0
    loop: start=0, step=1, limit=4
    $region2: #{ensembled_linear.1} parent=1 // loop_pre_header
      _
    $region3: #{ensembled_linear.1} parent=1 // loop_header
      %s18 = sphi 0, %s22
      %p19 = scmp.ge.s32.totalorder %s18, 4
      %s25 = sphi 0, %s51
      %s26 = sphi 0, %s47
      %s27 = sphi 0, %s43
      %s28 = sphi 0, %s39
      %s29 = sphi 0, %s25
      %s30 = sphi 0, %s26
      %s31 = sphi 0, %s27
      %s32 = sphi 0, %s28
      %s33 = sphi 0, %s29
      %s34 = sphi 0, %s30
      %s35 = sphi 0, %s31
      %s36 = sphi 0, %s32
      %s58 = sphi 0, %s60
      %s61 = sphi 0, %s58
      %s62 = sphi 0, %s61
      %s78 = sphi 0, %s62
      %s88 = sphi 0, %s90
      %s91 = sphi 0, %s88
      %s92 = sphi 0, %s91
      %s108 = sphi 0, %s92
      %s116 = sphi 0, %s118
      %s119 = sphi 0, %s116
      %s120 = sphi 0, %s119
      %s136 = sphi 0, %s120
      %s146 = sphi 0, %s148
      %s149 = sphi 0, %s146
      %s150 = sphi 0, %s149
      %s166 = sphi 0, %s150
    $region4: #{ensembled_linear.1} parent=1 // loop_header_branch
      %21 = sbr.rel (%p19) target = $region8
    $region5: #{ensembled_linear.1} parent=1 // loop_body
      %s23 = ssub.s32 %s18, 1
      %s24 = ssub.s32 %s18, 2
      %s37 = sadd.s32 1, %s28
      %p38 = scmp.ge.s32.totalorder %s37, 1
      %s39 = scalar_select %p38, 0, %s37
      %s40 = sadd.s32 1, %s27
      %s41 = scalar_select %p38, %s40, %s27
      %p42 = scmp.ge.s32.totalorder %s41, 1
      %s43 = scalar_select %p42, 0, %s41
      %s44 = sadd.s32 1, %s26
      %s45 = scalar_select %p42, %s44, %s26
      %p46 = scmp.ge.s32.totalorder %s45, 1
      %s47 = scalar_select %p46, 0, %s45
      %s48 = sadd.s32 1, %s25
      %s49 = scalar_select %p46, %s48, %s25
      %p50 = scmp.ge.s32.totalorder %s49, 2
      %s51 = scalar_select %p50, 0, %s49
      %s52 = ssub.s32 %s25, %s51
      %s53 = ssub.s32 %s26, %s47
      %s54 = sor.u32 %s52, %s53
      %s55 = ssub.s32 %s28, %s39
      %s56 = sor.u32 %s54, %s55
      %p57 = scmp.eq.s32.totalorder %s56, 0
      %s59 = sadd.s32 %s58, 1
      %s60 = scalar_select %p57, %s58, %s59
      %p63 = pneg %p57
      %p64 = scmp.eq.s32.totalorder %s18, 1
      %p65 = por %p63, %p64
      %p66 = scmp.ne.s32.totalorder %s58, %s61
      %p67 = scmp.eq.s32.totalorder %s18, 0
      %p68 = por %p66, %p67
      %p69 = scmp.ne.s32.totalorder %s58, %s61
      %p70 = scmp.eq.s32.totalorder %s23, 1
      %p71 = por %p69, %p70
      %p72 = scmp.ne.s32.totalorder %s61, %s62
      %p73 = scmp.eq.s32.totalorder %s23, 0
      %p74 = por %p72, %p73
      %p75 = scmp.ne.s32.totalorder %s61, %s62
      %p76 = scmp.eq.s32.totalorder %s24, 1
      %p77 = por %p75, %p76
      %p79 = scmp.ne.s32.totalorder %s62, %s78
      %p80 = scmp.eq.s32.totalorder %s24, 0
      %p81 = por %p79, %p80
      %s82 = ssub.s32 %s25, %s51
      %s83 = ssub.s32 %s28, %s39
      %s84 = sor.u32 %s82, %s83
      %s85 = ssub.s32 %s27, %s43
      %s86 = sor.u32 %s84, %s85
      %p87 = scmp.eq.s32.totalorder %s86, 0
      %s89 = sadd.s32 %s88, 1
      %s90 = scalar_select %p87, %s88, %s89
      %p93 = pneg %p87
      %p94 = scmp.eq.s32.totalorder %s18, 1
      %p95 = por %p93, %p94
      %p96 = scmp.ne.s32.totalorder %s88, %s91
      %p97 = scmp.eq.s32.totalorder %s18, 0
      %p98 = por %p96, %p97
      %p99 = scmp.ne.s32.totalorder %s88, %s91
      %p100 = scmp.eq.s32.totalorder %s23, 1
      %p101 = por %p99, %p100
      %p102 = scmp.ne.s32.totalorder %s91, %s92
      %p103 = scmp.eq.s32.totalorder %s23, 0
      %p104 = por %p102, %p103
      %p105 = scmp.ne.s32.totalorder %s91, %s92
      %p106 = scmp.eq.s32.totalorder %s24, 1
      %p107 = por %p105, %p106
      %p109 = scmp.ne.s32.totalorder %s92, %s108
      %p110 = scmp.eq.s32.totalorder %s24, 0
      %p111 = por %p109, %p110
      %s112 = ssub.s32 %s25, %s51
      %s113 = ssub.s32 %s27, %s43
      %s114 = sor.u32 %s112, %s113
      %p115 = scmp.eq.s32.totalorder %s114, 0
      %s117 = sadd.s32 %s116, 1
      %s118 = scalar_select %p115, %s116, %s117
      %p121 = pneg %p115
      %p122 = scmp.eq.s32.totalorder %s18, 1
      %p123 = por %p121, %p122
      %p124 = scmp.ne.s32.totalorder %s116, %s119
      %p125 = scmp.eq.s32.totalorder %s18, 0
      %p126 = por %p124, %p125
      %p127 = scmp.ne.s32.totalorder %s116, %s119
      %p128 = scmp.eq.s32.totalorder %s23, 1
      %p129 = por %p127, %p128
      %p130 = scmp.ne.s32.totalorder %s119, %s120
      %p131 = scmp.eq.s32.totalorder %s23, 0
      %p132 = por %p130, %p131
      %p133 = scmp.ne.s32.totalorder %s119, %s120
      %p134 = scmp.eq.s32.totalorder %s24, 1
      %p135 = por %p133, %p134
      %p137 = scmp.ne.s32.totalorder %s120, %s136
      %p138 = scmp.eq.s32.totalorder %s24, 0
      %p139 = por %p137, %p138
      %s140 = ssub.s32 %s25, %s51
      %s141 = ssub.s32 %s26, %s47
      %s142 = sor.u32 %s140, %s141
      %s143 = ssub.s32 %s27, %s43
      %s144 = sor.u32 %s142, %s143
      %p145 = scmp.eq.s32.totalorder %s144, 0
      %s147 = sadd.s32 %s146, 1
      %s148 = scalar_select %p145, %s146, %s147
      %p151 = pneg %p145
      %p152 = scmp.eq.s32.totalorder %s18, 1
      %p153 = por %p151, %p152
      %p154 = scmp.ne.s32.totalorder %s146, %s149
      %p155 = scmp.eq.s32.totalorder %s18, 0
      %p156 = por %p154, %p155
      %p157 = scmp.ne.s32.totalorder %s146, %s149
      %p158 = scmp.eq.s32.totalorder %s23, 1
      %p159 = por %p157, %p158
      %p160 = scmp.ne.s32.totalorder %s149, %s150
      %p161 = scmp.eq.s32.totalorder %s23, 0
      %p162 = por %p160, %p161
      %p163 = scmp.ne.s32.totalorder %s149, %s150
      %p164 = scmp.eq.s32.totalorder %s24, 1
      %p165 = por %p163, %p164
      %p167 = scmp.ne.s32.totalorder %s150, %s166
      %p168 = scmp.eq.s32.totalorder %s24, 0
      %p169 = por %p167, %p168
      %p170 = scmp.le.s32.totalorder 1, %s18
      %p171 = scmp.lt.s32.totalorder %s18, 3
      %p172 = pnand %p170, %p171
      %p173 = pneg %p172
      // Predicated region
      $region9: #{ensembled_linear.1} parent=5 // pred_check
        _
      $region10: #{ensembled_linear.1} parent=5 // pred_check_branch
        %175 = sbr.rel (%p172) target = $region12
      $region11: #{ensembled_linear.1} parent=5 // pred_region
        %s176 = ssub.s32 %s18, 1
      $region12: #{ensembled_linear.1} parent=5 // pred_fallthru
        _
      %p177 = scmp.lt.s32.totalorder %s18, 2
      // Predicated region
      $region13: #{ensembled_linear.1} parent=5 // pred_check
        %p178 = pneg %p177
      $region14: #{ensembled_linear.1} parent=5 // pred_check_branch
        %180 = sbr.rel (%p178) target = $region16
      $region15: #{ensembled_linear.1} parent=5 // pred_region
        // Predicated region
        $region17: #{ensembled_linear.1} parent=15 // pred_check
          %p181 = pneg %p68
        $region18: #{ensembled_linear.1} parent=15 // pred_check_branch
          %183 = sbr.rel (%p181) target = $region20
        $region19: #{ensembled_linear.1} parent=15 // pred_region
          %s184 = sand.u32 %s58, 1
          %s185 = scalar_lea.sflag [#allocation3], %s184
          %s186 = sand.u32 %s58, 1
          %s187 = smul.addr %s186, 16
          %s188 = scalar_lea.vmem [#allocation2], %s187
          %s189 = smul.u32 2, %s25
          %s191 = ssub.s32 256, 256
          %192 = vsyncadd %s185, %s191
          %s193 = sadd.s32 %s28, %s26
          %s194 = sadd.s32 %s193, %s189
          %s195 = smul.addr %s194, 128
          %s196 = scalar_lea.hbm %s0, %s195
          %s197 = sshll.u32 %s188, 4
          %s198 = int_to_ptr.vmem [resolvable:$true] %s197
          %203 = dma.hbm_to_vmem [thread:$0]  %s196, 256, %s198, %s185, 128, 128, 8
        $region20: #{ensembled_linear.1} parent=15 // pred_fallthru
          _
        // Predicated region
        $region21: #{ensembled_linear.1} parent=15 // pred_check
          %p204 = pneg %p98
        $region22: #{ensembled_linear.1} parent=15 // pred_check_branch
          %206 = sbr.rel (%p204) target = $region24
        $region23: #{ensembled_linear.1} parent=15 // pred_region
          %s207 = sand.u32 %s18, 1
          %s208 = scalar_lea.sflag [#allocation6], %s207
          %s209 = sand.u32 %s88, 1
          %s210 = smul.addr %s209, 64
          %s211 = scalar_lea.vmem [#allocation5], %s210
          %s212 = smul.u32 2, %s25
          %s213 = smul.u32 4, %s28
          %s215 = ssub.s32 1024, 1024
          %216 = vsyncadd %s208, %s215
          %s217 = sadd.s32 %s27, %s213
          %s218 = smul.addr %s212, 4
          %s219 = sadd.s32 %s217, %s218
          %s220 = smul.addr %s219, 128
          %s221 = scalar_lea.hbm %s1, %s220
          %s222 = sshll.u32 %s211, 4
          %s223 = int_to_ptr.vmem [resolvable:$true] %s222
          %228 = dma.hbm_to_vmem [thread:$0]  %s221, 1024, %s223, %s208, 128, 128, 8
        $region24: #{ensembled_linear.1} parent=15 // pred_fallthru
          _
        // Predicated region
        $region25: #{ensembled_linear.1} parent=15 // pred_check
          %p229 = pneg %p126
        $region26: #{ensembled_linear.1} parent=15 // pred_check_branch
          %231 = sbr.rel (%p229) target = $region28
        $region27: #{ensembled_linear.1} parent=15 // pred_region
          %s232 = sand.u32 %s18, 1
          %s233 = scalar_lea.sflag [#allocation6], %s232
          %s234 = sand.u32 %s116, 1
          %s235 = smul.addr %s234, 2
          %s236 = scalar_lea.vmem [#allocation7], %s235
          %s237 = smul.u32 2, %s25
          %s239 = ssub.s32 32, 32
          %240 = vsyncadd %s233, %s239
          %s241 = sadd.s32 %s27, %s237
          %s242 = smul.addr %s241, 16
          %s243 = scalar_lea.hbm %s2, %s242
          %s244 = sshll.u32 %s236, 4
          %s245 = int_to_ptr.vmem [resolvable:$true] %s244
          %250 = dma.hbm_to_vmem [thread:$0]  %s243, 32, %s245, %s233, 16, 16, 1
        $region28: #{ensembled_linear.1} parent=15 // pred_fallthru
          _
      $region16: #{ensembled_linear.1} parent=5 // pred_fallthru
        _
      %p251 = scmp.le.s32.totalorder 1, %s18
      %p252 = scmp.lt.s32.totalorder %s18, 3
      %p253 = pnand %p251, %p252
      %p254 = pneg %p253
      // Predicated region
      $region29: #{ensembled_linear.1} parent=5 // pred_check
        _
      $region30: #{ensembled_linear.1} parent=5 // pred_check_branch
        %256 = sbr.rel (%p253) target = $region32
      $region31: #{ensembled_linear.1} parent=5 // pred_region
        %s257 = ssub.s32 %s18, 1
        %s258 = sand.u32 %s61, 1
        %s259 = scalar_lea.sflag [#allocation3], %s258
        %s260 = sand.u32 %s61, 1
        %s261 = smul.addr %s260, 16
        %s262 = scalar_lea.vmem [#allocation2], %s261
        // Predicated region
        $region33: #{ensembled_linear.1} parent=31 // pred_check
          %p263 = pneg %p74
        $region34: #{ensembled_linear.1} parent=31 // pred_check_branch
          %265 = sbr.rel (%p263) target = $region36
        $region35: #{ensembled_linear.1} parent=31 // pred_region
          %266 = dma.done %s259, 256
        $region36: #{ensembled_linear.1} parent=31 // pred_fallthru
          _
        %s267 = sand.u32 %s23, 1
        %s268 = scalar_lea.sflag [#allocation6], %s267
        %s269 = sand.u32 %s91, 1
        %s270 = smul.addr %s269, 64
        %s271 = scalar_lea.vmem [#allocation5], %s270
        // Predicated region
        $region37: #{ensembled_linear.1} parent=31 // pred_check
          %p272 = pneg %p104
        $region38: #{ensembled_linear.1} parent=31 // pred_check_branch
          %274 = sbr.rel (%p272) target = $region40
        $region39: #{ensembled_linear.1} parent=31 // pred_region
          %275 = dma.done %s268, 1024
        $region40: #{ensembled_linear.1} parent=31 // pred_fallthru
          _
        %s276 = sand.u32 %s23, 1
        %s277 = scalar_lea.sflag [#allocation6], %s276
        %s278 = sand.u32 %s119, 1
        %s279 = smul.addr %s278, 2
        %s280 = scalar_lea.vmem [#allocation7], %s279
        // Predicated region
        $region41: #{ensembled_linear.1} parent=31 // pred_check
          %p281 = pneg %p132
        $region42: #{ensembled_linear.1} parent=31 // pred_check_branch
          %283 = sbr.rel (%p281) target = $region44
        $region43: #{ensembled_linear.1} parent=31 // pred_region
          %284 = dma.done %s277, 32
        $region44: #{ensembled_linear.1} parent=31 // pred_fallthru
          _
        %s285 = sand.u32 %s61, 1
        %s286 = scalar_lea.sflag [#allocation3], %s285
        %s287 = sand.u32 %s61, 1
        %s288 = smul.addr %s287, 16
        %s289 = scalar_lea.vmem [#allocation2], %s288
        %p290 = pneg %p74
        %p291 = pneg %p71
        %s292 = sand.u32 %s23, 1
        %s293 = scalar_lea.sflag [#allocation6], %s292
        %s294 = sand.u32 %s91, 1
        %s295 = smul.addr %s294, 64
        %s296 = scalar_lea.vmem [#allocation5], %s295
        %p297 = pneg %p104
        %p298 = pneg %p101
        %s299 = sand.u32 %s23, 1
        %s300 = scalar_lea.sflag [#allocation6], %s299
        %s301 = sand.u32 %s119, 1
        %s302 = smul.addr %s301, 2
        %s303 = scalar_lea.vmem [#allocation7], %s302
        %p304 = pneg %p132
        %p305 = pneg %p129
        %p306 = pneg %p162
        %p307 = pneg %p159
        %s308 = sand.u32 %s149, 1
        %s309 = scalar_lea.sflag [#allocation4], %s308
        %s310 = sand.u32 %s149, 1
        %s311 = smul.addr %s310, 16
        %s312 = scalar_lea.vmem [#allocation8], %s311
        %s313 = smul.u32 2, %s29
        %s314 = smul.u32 2, %s29
        %s315 = smul.u32 4, %s32
        %s316 = smul.u32 2, %s29
        %s317 = smul.u32 2, %s29
        %v318 = vld [vmem:[%s262] sm:$0xff]
        %v319 = vld [vmem:[%s262 + $0x8] sm:$0xff]
        %v320 = vld [vmem:[%s271] sm:$0xff]
        %v321 = vld [vmem:[%s271 + $0x8] sm:$0xff]
        %v322 = vld [vmem:[%s271 + $0x10] sm:$0xff]
        %v323 = vld [vmem:[%s271 + $0x18] sm:$0xff]
        %v324 = vld [vmem:[%s271 + $0x20] sm:$0xff]
        %v325 = vld [vmem:[%s271 + $0x28] sm:$0xff]
        %v326 = vld [vmem:[%s271 + $0x30] sm:$0xff]
        %v327 = vld [vmem:[%s271 + $0x38] sm:$0xff]
        %v328 = vld [vmem:[%s280] sm:$0x1]
        %v329 = vld [vmem:[%s280 + $0x1] sm:$0x1]
        %v332 = vlaneseq
        %v333 = vshrl.u32 %v332, 7
        %v334 = vsub.s32 0, %v333
        %v335 = vrot.slane %v328, %v334
        %v336 = vlaneseq
        %v337 = vshrl.u32 %v336, 7
        %v338 = vsub.s32 0, %v337
        %v339 = vrot.slane %v329, %v338
        %vm342 = vcmask 261120
        %v344 = vsel %vm342, %v318, 0
        %346 = vmatprep.subr.mxu0 0.0
        %347 = vmatpush1.msra.mxu0 0.0
        %348 = vmatprep.subr.mxu0 0.0
        %349 = vmatpush1.msra.mxu0 0.0
        %350 = vmatprep.subr.mxu0 0.0
        %351 = vmatpush1.msra.mxu0 0.0
        %352 = vmatprep.subr.mxu0 0.0
        %353 = vmatpush1.msra.mxu0 0.0
        %354 = vmatprep.subr.mxu0 0.0
        %355 = vmatpush1.msra.mxu0 0.0
        %356 = vmatprep.subr.mxu0 0.0
        %357 = vmatpush1.msra.mxu0 0.0
        %358 = vmatprep.subr.mxu0 0.0
        %359 = vmatpush1.msra.mxu0 0.0
        %360 = vmatprep.subr.mxu0 0.0
        %361 = vmatpush1.msra.mxu0 0.0
        %362 = vmatprep.subr.mxu0 0.0
        %363 = vmatpush1.msra.mxu0 0.0
        %364 = vmatprep.subr.mxu0 0.0
        %365 = vmatpush1.msra.mxu0 0.0
        %366 = vmatprep.subr.mxu0 0.0
        %367 = vmatpush1.msra.mxu0 0.0
        %368 = vmatprep.subr.mxu0 0.0
        %369 = vmatpush1.msra.mxu0 0.0
        %370 = vmatprep.subr.mxu0 0.0
        %371 = vmatpush1.msra.mxu0 %v323
        %372 = vmatprep.subr.mxu0 0.0
        %373 = vmatpush1.msra.mxu0 %v322
        %374 = vmatprep.subr.mxu0 0.0
        %375 = vmatpush1.msra.mxu0 %v321
        %376 = vmatprep.subr.mxu0 0.0
        %377 = vmatpush1.msra.mxu0 %v320
        %378 = vmatprep.subr.mxu0 0.0
        %379 = vmatpush2.msra.mxu0 0.0
        %380 = vmatprep.subr.mxu0 0.0
        %381 = vmatpush2.msra.mxu0 0.0
        %382 = vmatprep.subr.mxu0 0.0
        %383 = vmatpush2.msra.mxu0 0.0
        %384 = vmatprep.subr.mxu0 0.0
        %385 = vmatpush2.msra.mxu0 0.0
        %386 = vmatprep.subr.mxu0 0.0
        %387 = vmatpush2.msra.mxu0 0.0
        %388 = vmatprep.subr.mxu0 0.0
        %389 = vmatpush2.msra.mxu0 0.0
        %390 = vmatprep.subr.mxu0 0.0
        %391 = vmatpush2.msra.mxu0 0.0
        %392 = vmatprep.subr.mxu0 0.0
        %393 = vmatpush2.msra.mxu0 0.0
        %394 = vmatprep.subr.mxu0 0.0
        %395 = vmatpush2.msra.mxu0 0.0
        %396 = vmatprep.subr.mxu0 0.0
        %397 = vmatpush2.msra.mxu0 0.0
        %398 = vmatprep.subr.mxu0 0.0
        %399 = vmatpush2.msra.mxu0 0.0
        %400 = vmatprep.subr.mxu0 0.0
        %401 = vmatpush2.msra.mxu0 0.0
        %402 = vmatprep.subr.mxu0 0.0
        %403 = vmatpush2.msra.mxu0 0.0
        %404 = vmatprep.subr.mxu0 0.0
        %405 = vmatpush2.msra.mxu0 0.0
        %406 = vmatprep.subr.mxu0 0.0
        %407 = vmatpush2.msra.mxu0 0.0
        %408 = vmatprep.subr.mxu0 0.0
        %409 = vmatpush2.msra.mxu0 0.0
        %410 = vmatprep.mubr.f32.mxu0 0.0
        %411 = vmatmul.mubr.f32.gmra.mxu0 %v344
        %v412 = vpop.f32.mrf.mxu0
        %v413 = vadd.f32 %v335, %v412
        %v414 = vpop.f32.mrf.mxu0
        %415 = vdwg.mxu0
        %v417 = vsel %vm342, %v319, 0
        %419 = vmatprep.subr.mxu0 0.0
        %420 = vmatpush1.msra.mxu0 0.0
        %421 = vmatprep.subr.mxu0 0.0
        %422 = vmatpush1.msra.mxu0 0.0
        %423 = vmatprep.subr.mxu0 0.0
        %424 = vmatpush1.msra.mxu0 0.0
        %425 = vmatprep.subr.mxu0 0.0
        %426 = vmatpush1.msra.mxu0 0.0
        %427 = vmatprep.subr.mxu0 0.0
        %428 = vmatpush1.msra.mxu0 0.0
        %429 = vmatprep.subr.mxu0 0.0
        %430 = vmatpush1.msra.mxu0 0.0
        %431 = vmatprep.subr.mxu0 0.0
        %432 = vmatpush1.msra.mxu0 0.0
        %433 = vmatprep.subr.mxu0 0.0
        %434 = vmatpush1.msra.mxu0 0.0
        %435 = vmatprep.subr.mxu0 0.0
        %436 = vmatpush1.msra.mxu0 0.0
        %437 = vmatprep.subr.mxu0 0.0
        %438 = vmatpush1.msra.mxu0 0.0
        %439 = vmatprep.subr.mxu0 0.0
        %440 = vmatpush1.msra.mxu0 0.0
        %441 = vmatprep.subr.mxu0 0.0
        %442 = vmatpush1.msra.mxu0 0.0
        %443 = vmatprep.subr.mxu0 0.0
        %444 = vmatpush1.msra.mxu0 %v327
        %445 = vmatprep.subr.mxu0 0.0
        %446 = vmatpush1.msra.mxu0 %v326
        %447 = vmatprep.subr.mxu0 0.0
        %448 = vmatpush1.msra.mxu0 %v325
        %449 = vmatprep.subr.mxu0 0.0
        %450 = vmatpush1.msra.mxu0 %v324
        %451 = vmatprep.subr.mxu0 0.0
        %452 = vmatpush2.msra.mxu0 0.0
        %453 = vmatprep.subr.mxu0 0.0
        %454 = vmatpush2.msra.mxu0 0.0
        %455 = vmatprep.subr.mxu0 0.0
        %456 = vmatpush2.msra.mxu0 0.0
        %457 = vmatprep.subr.mxu0 0.0
        %458 = vmatpush2.msra.mxu0 0.0
        %459 = vmatprep.subr.mxu0 0.0
        %460 = vmatpush2.msra.mxu0 0.0
        %461 = vmatprep.subr.mxu0 0.0
        %462 = vmatpush2.msra.mxu0 0.0
        %463 = vmatprep.subr.mxu0 0.0
        %464 = vmatpush2.msra.mxu0 0.0
        %465 = vmatprep.subr.mxu0 0.0
        %466 = vmatpush2.msra.mxu0 0.0
        %467 = vmatprep.subr.mxu0 0.0
        %468 = vmatpush2.msra.mxu0 0.0
        %469 = vmatprep.subr.mxu0 0.0
        %470 = vmatpush2.msra.mxu0 0.0
        %471 = vmatprep.subr.mxu0 0.0
        %472 = vmatpush2.msra.mxu0 0.0
        %473 = vmatprep.subr.mxu0 0.0
        %474 = vmatpush2.msra.mxu0 0.0
        %475 = vmatprep.subr.mxu0 0.0
        %476 = vmatpush2.msra.mxu0 0.0
        %477 = vmatprep.subr.mxu0 0.0
        %478 = vmatpush2.msra.mxu0 0.0
        %479 = vmatprep.subr.mxu0 0.0
        %480 = vmatpush2.msra.mxu0 0.0
        %481 = vmatprep.subr.mxu0 0.0
        %482 = vmatpush2.msra.mxu0 0.0
        %483 = vmatprep.mubr.f32.mxu0 0.0
        %484 = vmatmul.mubr.f32.gmra.mxu0 %v417
        %v485 = vpop.f32.mrf.mxu0
        %v486 = vadd.f32 %v339, %v485
        %v487 = vpop.f32.mrf.mxu0
        %488 = vdwg.mxu0
        %489 = vst.msk [vmem:[%s312] sm:$0xff] %vm342, %v413
        %490 = vst.msk [vmem:[%s312 + $0x8] sm:$0xff] %vm342, %v486
        %s491 = sand.u32 %s149, 1
        %s492 = scalar_lea.sflag [#allocation4], %s491
        %s493 = sand.u32 %s149, 1
        %s494 = smul.addr %s493, 16
        %s495 = scalar_lea.vmem [#allocation8], %s494
        // Predicated region
        $region45: #{ensembled_linear.1} parent=31 // pred_check
          %p496 = pneg %p159
        $region46: #{ensembled_linear.1} parent=31 // pred_check_branch
          %498 = sbr.rel (%p496) target = $region48
        $region47: #{ensembled_linear.1} parent=31 // pred_region
          %s499 = smul.u32 2, %s29
          %s501 = ssub.s32 256, 256
          %502 = vsyncadd %s492, %s501
          %s503 = sadd.s32 %s31, %s30
          %s504 = sadd.s32 %s503, %s499
          %s505 = smul.addr %s504, 128
          %s506 = scalar_lea.hbm %s3, %s505
          %s507 = sshll.u32 %s495, 4
          %s508 = int_to_ptr.vmem [resolvable:$true] %s507
          %513 = dma.vmem_to_hbm [thread:$0]  %s508, 256, %s506, %s492, 128, 128, 8
        $region48: #{ensembled_linear.1} parent=31 // pred_fallthru
          _
      $region32: #{ensembled_linear.1} parent=5 // pred_fallthru
        _
      %p514 = scmp.le.s32.totalorder 2, %s18
      // Predicated region
      $region49: #{ensembled_linear.1} parent=5 // pred_check
        %p515 = pneg %p514
      $region50: #{ensembled_linear.1} parent=5 // pred_check_branch
        %517 = sbr.rel (%p515) target = $region52
      $region51: #{ensembled_linear.1} parent=5 // pred_region
        %s518 = ssub.s32 %s18, 2
        // Predicated region
        $region53: #{ensembled_linear.1} parent=51 // pred_check
          %p519 = pneg %p165
        $region54: #{ensembled_linear.1} parent=51 // pred_check_branch
          %521 = sbr.rel (%p519) target = $region56
        $region55: #{ensembled_linear.1} parent=51 // pred_region
          %s522 = sand.u32 %s150, 1
          %s523 = scalar_lea.sflag [#allocation4], %s522
          %s524 = sand.u32 %s150, 1
          %s525 = smul.addr %s524, 16
          %s526 = scalar_lea.vmem [#allocation8], %s525
          %527 = dma.done %s523, 256
        $region56: #{ensembled_linear.1} parent=51 // pred_fallthru
          _
      $region52: #{ensembled_linear.1} parent=5 // pred_fallthru
        _
    $region6: #{ensembled_linear.1} parent=1 // loop_footer
      %s22 = sadd.s32 1, %s18
    $region7: #{ensembled_linear.1} parent=1 // loop_footer_branch
      %17 = sbr.rel target = $region3
    $region8: #{ensembled_linear.1} parent=1 // loop_exit
      _
    %528 = vsyncpa [#allocation3], 1
    %s529 = scalar_lea.sflag [#allocation3], 1
    %530 = vsyncpa %s529, 1
    %531 = vsyncpa [#allocation6], 1
    %s532 = scalar_lea.sflag [#allocation6], 1
    %533 = vsyncpa %s532, 1
    %534 = vsyncpa [#allocation4], 1
    %s535 = scalar_lea.sflag [#allocation4], 1
    %536 = vsyncpa %s535, 1

</llo_original>
